<compile_context>
chip_gen: v5e
topology: v5e:2x2
jax: 0.10.0
libtpu: 0.0.40
codegen_flags: <defaults>
</compile_context>

<pallas_src>
import functools

import jax
import jax.numpy as jnp
from jax.experimental import pallas as pl
from jax.experimental.pallas import tpu as pltpu

LN_EPS = 1e-5
_INV_SQRT2 = 0.7071067811865476


def _erf_approx(z):
    """erf via Abramowitz & Stegun 7.1.26 (|abs err| <= 1.5e-7).

    Uses only exp + plain VPU arithmetic so it lowers cleanly in Mosaic
    (no reliance on a lax.erf lowering rule).
    """
    p = 0.3275911
    a1, a2, a3, a4, a5 = (0.254829592, -0.284496736, 1.421413741,
                          -1.453152027, 1.061405429)
    sgn = jnp.where(z >= 0.0, 1.0, -1.0)
    az = jnp.abs(z)
    t = 1.0 / (1.0 + p * az)
    poly = ((((a5 * t + a4) * t + a3) * t + a2) * t + a1) * t
    return sgn * (1.0 - poly * jnp.exp(-(az * az)))


def _gelu_exact(u):
    # PyTorch nn.GELU() default (approximate='none'): x * 0.5 * (1 + erf(x/sqrt(2)))
    return 0.5 * u * (1.0 + _erf_approx(u * _INV_SQRT2))


def _gmlp_block_kernel(x_ref, w_in_ref, b_in_ref, gamma_ref, beta_ref,
                       w_sp_ref, b_sp_ref, w_out_ref, b_out_ref, o_ref):
    bt, seq, d = x_ref.shape
    ff = w_in_ref.shape[1]
    f2 = ff // 2

    # ---- input projection + exact GELU over the merged (bt*seq) row axis ----
    # Native-dtype operands on the MXU, f32 accumulation.
    x2 = x_ref[...].reshape(bt * seq, d)
    u = jnp.dot(x2, w_in_ref[...], preferred_element_type=jnp.float32)
    u = _gelu_exact(u + b_in_ref[...])                       # (bt*seq, ff) f32

    res = u[:, :f2]                                          # residual half
    gate = u[:, f2:]                                         # gated half

    # ---- LayerNorm(gate) over the feature axis: biased var, eps=1e-5 ----
    mean = jnp.mean(gate, axis=-1, keepdims=True)
    gc = gate - mean
    var = jnp.mean(gc * gc, axis=-1, keepdims=True)
    g = gc * jax.lax.rsqrt(var + LN_EPS) * gamma_ref[...] + beta_ref[...]

    g3 = g.reshape(bt, seq, f2)
    res3 = res.reshape(bt, seq, f2)

    w_sp = w_sp_ref[...]                                     # (seq, seq)
    b_sp = b_sp_ref[...]                                     # (seq, 1)  f32
    w_out = w_out_ref[...]                                   # (f2, dim)
    b_out = b_out_ref[...]                                   # (1, dim)  f32

    # ---- spatial gating (mixes the sequence axis) + output projection ----
    # Static unroll over the small batch tile: every matmul stays a plain 2-D
    # MXU dot and there are no in-kernel transposes.
    for b in range(bt):
        sg = jnp.dot(w_sp, g3[b].astype(w_sp.dtype),
                     preferred_element_type=jnp.float32) + b_sp
        y = sg * res3[b]                                     # gate * residual
        out = jnp.dot(y.astype(w_out.dtype), w_out,
                      preferred_element_type=jnp.float32) + b_out
        o_ref[b] = out.astype(o_ref.dtype)


@functools.partial(jax.jit, static_argnames=("batch_tile",))
def gmlp_block(x, w_in, b_in, gamma, beta, w_sp, b_sp, w_out, b_out,
               *, batch_tile=1):
    """Fused gMLPBlock forward: output_proj(gating_unit(gelu(input_proj(x)))).

    x:     [B, S, dim]
    w_in:  [dim, ff_dim]      b_in:  [ff_dim]       (input_proj, x @ W layout)
    gamma: [ff_dim//2]        beta:  [ff_dim//2]    (GatingUnit LayerNorm affine)
    w_sp:  [S, S]             b_sp:  [S]            (GatingUnit spatial weights, heads=1)
    w_out: [ff_dim//2, dim]   b_out: [dim]          (output_proj, x @ W layout)
    """
    B, S, D = x.shape
    F = w_in.shape[1]
    assert F % 2 == 0, "ff_dim must be even (chunk into residual/gate halves)"
    F2 = F // 2

    # Pad the batch so the grid covers it exactly; tail rows are sliced off.
    num_blocks = pl.cdiv(B, batch_tile)
    Bp = num_blocks * batch_tile
    if Bp != B:
        x = jnp.pad(x, ((0, Bp - B), (0, 0), (0, 0)))

    # Hoist the small per-feature params to f32 once, as lane-dense 2-D slabs.
    b_in2 = b_in.reshape(1, F).astype(jnp.float32)
    gamma2 = gamma.reshape(1, F2).astype(jnp.float32)
    beta2 = beta.reshape(1, F2).astype(jnp.float32)
    b_sp2 = b_sp.reshape(S, 1).astype(jnp.float32)
    b_out2 = b_out.reshape(1, D).astype(jnp.float32)

    const = lambda i: (0, 0)   # weights/params: same block every step -> fetched once

    out = pl.pallas_call(
        _gmlp_block_kernel,
        out_shape=jax.ShapeDtypeStruct((Bp, S, D), x.dtype),
        grid_spec=pl.GridSpec(
            grid=(num_blocks,),
            in_specs=[
                pl.BlockSpec((batch_tile, S, D), lambda i: (i, 0, 0)),  # x slab
                pl.BlockSpec((D, F), const),       # W_in
                pl.BlockSpec((1, F), const),       # b_in
                pl.BlockSpec((1, F2), const),      # LayerNorm gamma
                pl.BlockSpec((1, F2), const),      # LayerNorm beta
                pl.BlockSpec((S, S), const),       # spatial weights (heads=1)
                pl.BlockSpec((S, 1), const),       # spatial biases
                pl.BlockSpec((F2, D), const),      # W_out
                pl.BlockSpec((1, D), const),       # b_out
            ],
            out_specs=pl.BlockSpec((batch_tile, S, D), lambda i: (i, 0, 0)),
        ),
        compiler_params=pltpu.CompilerParams(
            # Batch tiles are independent -> shard across v7x's 2 TensorCores.
            dimension_semantics=("parallel",),
        ),
    )(x, w_in, b_in2, gamma2, beta2, w_sp, b_sp2, w_out, b_out2)

    return out[:B]


def _reference(x, w_in, b_in, gamma, beta, w_sp, b_sp, w_out, b_out):
    """Pure-JAX reference matching the PyTorch gMLPBlock defaults."""
    xf = x.astype(jnp.float32)
    u = jnp.einsum("bsd,df->bsf", xf, w_in.astype(jnp.float32)) + b_in
    u = jax.nn.gelu(u, approximate=False)          # PyTorch nn.GELU() is exact erf
    f2 = u.shape[-1] // 2
    res, gate = u[..., :f2], u[..., f2:]
    mean = gate.mean(-1, keepdims=True)
    var = ((gate - mean) ** 2).mean(-1, keepdims=True)
    g = (gate - mean) * jax.lax.rsqrt(var + LN_EPS) * gamma + beta
    sg = jnp.einsum("ts,bsf->btf", w_sp.astype(jnp.float32), g) + b_sp[None, :, None]
    y = sg * res
    out = jnp.einsum("bsf,fd->bsd", y, w_out.astype(jnp.float32)) + b_out
    return out.astype(x.dtype)


if __name__ == "__main__":
    key = jax.random.PRNGKey(0)
    # Small but lane/sublane-dense shapes: dim=128, ff_dim=256 (gate half = 128), seq=8.
    B, S, DIM, FF = 2, 8, 128, 256
    F2 = FF // 2

    ks = jax.random.split(key, 6)
    x = jax.random.normal(ks[0], (B, S, DIM), dtype=jnp.float32)

    # input_proj Linear(dim, ff_dim)
    w_in = jax.random.normal(ks[1], (DIM, FF), dtype=jnp.float32) * (DIM ** -0.5)
    b_in = jax.random.normal(ks[2], (FF,), dtype=jnp.float32) * 0.01

    # GatingUnit LayerNorm defaults (gamma=1, beta=0).
    gamma = jnp.ones((F2,), dtype=jnp.float32)
    beta = jnp.zeros((F2,), dtype=jnp.float32)

    # GatingUnit spatial weights: uniform(+-init_range/seq_len), biases = ones.
    init_range = 1e-3
    w_sp = jax.random.uniform(ks[3], (S, S), jnp.float32,
                              minval=-init_range / S, maxval=init_range / S)
    b_sp = jnp.ones((S,), dtype=jnp.float32)

    # output_proj Linear(ff_dim//2, dim)
    w_out = jax.random.normal(ks[4], (F2, DIM), dtype=jnp.float32) * (F2 ** -0.5)
    b_out = jax.random.normal(ks[5], (DIM,), dtype=jnp.float32) * 0.01

    out = gmlp_block(x, w_in, b_in, gamma, beta, w_sp, b_sp, w_out, b_out,
                     batch_tile=1)
    out = jax.block_until_ready(out)

    ref = _reference(x, w_in, b_in, gamma, beta, w_sp, b_sp, w_out, b_out)
    assert out.shape == (B, S, DIM)
    max_err = jnp.max(jnp.abs(out - ref))
    # 1e-3 tolerance covers MXU f32-pass differences vs. the XLA reference and
    # the 1.5e-7 erf-polynomial error.
    assert jnp.allclose(out, ref, atol=1e-3, rtol=1e-3), (
        f"mismatch vs reference (max abs err = {max_err})")

    print("KERNEL_OK")
</pallas_src>

<mosaic_0001>
module attributes {stable_mosaic.version = 11 : i64} {
  func.func @_gmlp_block_kernel(%arg0: i32, %arg1: memref<1x8x128xf32, #tpu.memory_space<vmem>>, %arg2: memref<128x256xf32, #tpu.memory_space<vmem>>, %arg3: memref<1x256xf32, #tpu.memory_space<vmem>>, %arg4: memref<1x128xf32, #tpu.memory_space<vmem>>, %arg5: memref<1x128xf32, #tpu.memory_space<vmem>>, %arg6: memref<8x8xf32, #tpu.memory_space<vmem>>, %arg7: memref<8x1xf32, #tpu.memory_space<vmem>>, %arg8: memref<128x128xf32, #tpu.memory_space<vmem>>, %arg9: memref<1x128xf32, #tpu.memory_space<vmem>>, %arg10: memref<1x8x128xf32, #tpu.memory_space<vmem>>) attributes {dimension_semantics = [#tpu.dimension_semantics<parallel>], iteration_bounds = array<i64: 2>, scalar_prefetch = 0 : i64, scratch_operands = 0 : i64, tpu.core_type = #tpu.core_type<tc>, window_params = [{transform_indices = @transform_0, window_bounds = array<i64: 1, 8, 128>}, {pipeline_mode = #tpu.pipeline_mode<synchronous>, transform_indices = @transform_1, window_bounds = array<i64: 128, 256>}, {pipeline_mode = #tpu.pipeline_mode<synchronous>, transform_indices = @transform_2, window_bounds = array<i64: 1, 256>}, {pipeline_mode = #tpu.pipeline_mode<synchronous>, transform_indices = @transform_3, window_bounds = array<i64: 1, 128>}, {pipeline_mode = #tpu.pipeline_mode<synchronous>, transform_indices = @transform_4, window_bounds = array<i64: 1, 128>}, {pipeline_mode = #tpu.pipeline_mode<synchronous>, transform_indices = @transform_5, window_bounds = array<i64: 8, 8>}, {pipeline_mode = #tpu.pipeline_mode<synchronous>, transform_indices = @transform_6, window_bounds = array<i64: 8, 1>}, {pipeline_mode = #tpu.pipeline_mode<synchronous>, transform_indices = @transform_7, window_bounds = array<i64: 128, 128>}, {pipeline_mode = #tpu.pipeline_mode<synchronous>, transform_indices = @transform_8, window_bounds = array<i64: 1, 128>}, {transform_indices = @transform_9, window_bounds = array<i64: 1, 8, 128>}]} {
    %c0 = arith.constant 0 : index
    %c0_0 = arith.constant 0 : index
    %c0_1 = arith.constant 0 : index
    %0 = vector.load %arg1[%c0, %c0_0, %c0_1] : memref<1x8x128xf32, #tpu.memory_space<vmem>>, vector<1x8x128xf32>
    %1 = vector.shape_cast %0 : vector<1x8x128xf32> to vector<8x128xf32>
    %c0_2 = arith.constant 0 : index
    %c0_3 = arith.constant 0 : index
    %2 = vector.load %arg2[%c0_2, %c0_3] : memref<128x256xf32, #tpu.memory_space<vmem>>, vector<128x256xf32>
    %cst = arith.constant dense<0.000000e+00> : vector<8x256xf32>
    %3 = tpu.matmul %1, %2, %cst {dimension_numbers = #tpu.dot_dimension_numbers<[1], [0], [0], [1], [0, 0, 1, 1], [], []>} : vector<8x128xf32>, vector<128x256xf32>, vector<8x256xf32> -> vector<8x256xf32>
    %c0_4 = arith.constant 0 : index
    %c0_5 = arith.constant 0 : index
    %4 = vector.load %arg3[%c0_4, %c0_5] : memref<1x256xf32, #tpu.memory_space<vmem>>, vector<1x256xf32>
    %5 = vector.broadcast %4 : vector<1x256xf32> to vector<8x256xf32>
    %6 = arith.addf %3, %5 : vector<8x256xf32>
    %cst_6 = arith.constant 5.000000e-01 : f32
    %7 = vector.broadcast %cst_6 : f32 to vector<8x256xf32>
    %8 = arith.mulf %7, %6 : vector<8x256xf32>
    %cst_7 = arith.constant 0.707106769 : f32
    %9 = vector.broadcast %cst_7 : f32 to vector<8x256xf32>
    %10 = arith.mulf %6, %9 : vector<8x256xf32>
    %cst_8 = arith.constant 0.000000e+00 : f32
    %11 = vector.broadcast %cst_8 : f32 to vector<8x256xf32>
    %12 = arith.cmpf oge, %10, %11 : vector<8x256xf32>
    %cst_9 = arith.constant 1.000000e+00 : f32
    %cst_10 = arith.constant -1.000000e+00 : f32
    %13 = vector.broadcast %cst_9 : f32 to vector<8x256xf32>
    %14 = vector.broadcast %cst_10 : f32 to vector<8x256xf32>
    %15 = arith.select %12, %13, %14 : vector<8x256xi1>, vector<8x256xf32>
    %16 = math.absf %10 : vector<8x256xf32>
    %cst_11 = arith.constant 0.327591091 : f32
    %17 = vector.broadcast %cst_11 : f32 to vector<8x256xf32>
    %18 = arith.mulf %17, %16 : vector<8x256xf32>
    %cst_12 = arith.constant 1.000000e+00 : f32
    %19 = vector.broadcast %cst_12 : f32 to vector<8x256xf32>
    %20 = arith.addf %19, %18 : vector<8x256xf32>
    %cst_13 = arith.constant 1.000000e+00 : f32
    %21 = vector.broadcast %cst_13 : f32 to vector<8x256xf32>
    %22 = arith.divf %21, %20 : vector<8x256xf32>
    %cst_14 = arith.constant 1.06140542 : f32
    %23 = vector.broadcast %cst_14 : f32 to vector<8x256xf32>
    %24 = arith.mulf %23, %22 : vector<8x256xf32>
    %cst_15 = arith.constant -1.45315206 : f32
    %25 = vector.broadcast %cst_15 : f32 to vector<8x256xf32>
    %26 = arith.addf %24, %25 : vector<8x256xf32>
    %27 = arith.mulf %26, %22 : vector<8x256xf32>
    %cst_16 = arith.constant 1.42141378 : f32
    %28 = vector.broadcast %cst_16 : f32 to vector<8x256xf32>
    %29 = arith.addf %27, %28 : vector<8x256xf32>
    %30 = arith.mulf %29, %22 : vector<8x256xf32>
    %cst_17 = arith.constant -0.284496725 : f32
    %31 = vector.broadcast %cst_17 : f32 to vector<8x256xf32>
    %32 = arith.addf %30, %31 : vector<8x256xf32>
    %33 = arith.mulf %32, %22 : vector<8x256xf32>
    %cst_18 = arith.constant 0.254829586 : f32
    %34 = vector.broadcast %cst_18 : f32 to vector<8x256xf32>
    %35 = arith.addf %33, %34 : vector<8x256xf32>
    %36 = arith.mulf %35, %22 : vector<8x256xf32>
    %37 = arith.mulf %16, %16 : vector<8x256xf32>
    %cst_19 = arith.constant 0.000000e+00 : f32
    %38 = vector.broadcast %cst_19 : f32 to vector<8x256xf32>
    %39 = arith.subf %38, %37 : vector<8x256xf32>
    %40 = math.exp %39 : vector<8x256xf32>
    %41 = arith.mulf %36, %40 : vector<8x256xf32>
    %cst_20 = arith.constant 1.000000e+00 : f32
    %42 = vector.broadcast %cst_20 : f32 to vector<8x256xf32>
    %43 = arith.subf %42, %41 : vector<8x256xf32>
    %44 = arith.mulf %15, %43 : vector<8x256xf32>
    %cst_21 = arith.constant 1.000000e+00 : f32
    %45 = vector.broadcast %cst_21 : f32 to vector<8x256xf32>
    %46 = arith.addf %45, %44 : vector<8x256xf32>
    %47 = arith.mulf %8, %46 : vector<8x256xf32>
    %48 = vector.extract_strided_slice %47 {offsets = [0, 0], sizes = [8, 128], strides = [1, 1]} : vector<8x256xf32> to vector<8x128xf32>
    %49 = vector.extract_strided_slice %47 {offsets = [0, 128], sizes = [8, 128], strides = [1, 1]} : vector<8x256xf32> to vector<8x128xf32>
    %cst_22 = arith.constant dense<0.000000e+00> : vector<8xf32>
    %50 = vector.multi_reduction <add>, %49, %cst_22 [1] : vector<8x128xf32> to vector<8xf32>
    %51 = vector.shape_cast %50 : vector<8xf32> to vector<8x1xf32>
    %cst_23 = arith.constant 1.280000e+02 : f32
    %52 = vector.broadcast %cst_23 : f32 to vector<8x1xf32>
    %53 = arith.divf %51, %52 : vector<8x1xf32>
    %54 = vector.broadcast %53 : vector<8x1xf32> to vector<8x128xf32>
    %55 = arith.subf %49, %54 : vector<8x128xf32>
    %56 = arith.mulf %55, %55 : vector<8x128xf32>
    %cst_24 = arith.constant dense<0.000000e+00> : vector<8xf32>
    %57 = vector.multi_reduction <add>, %56, %cst_24 [1] : vector<8x128xf32> to vector<8xf32>
    %58 = vector.shape_cast %57 : vector<8xf32> to vector<8x1xf32>
    %cst_25 = arith.constant 1.280000e+02 : f32
    %59 = vector.broadcast %cst_25 : f32 to vector<8x1xf32>
    %60 = arith.divf %58, %59 : vector<8x1xf32>
    %cst_26 = arith.constant 9.99999974E-6 : f32
    %61 = vector.broadcast %cst_26 : f32 to vector<8x1xf32>
    %62 = arith.addf %60, %61 : vector<8x1xf32>
    %63 = math.rsqrt %62 : vector<8x1xf32>
    %64 = vector.broadcast %63 : vector<8x1xf32> to vector<8x128xf32>
    %65 = arith.mulf %55, %64 : vector<8x128xf32>
    %c0_27 = arith.constant 0 : index
    %c0_28 = arith.constant 0 : index
    %66 = vector.load %arg4[%c0_27, %c0_28] : memref<1x128xf32, #tpu.memory_space<vmem>>, vector<1x128xf32>
    %67 = vector.broadcast %66 : vector<1x128xf32> to vector<8x128xf32>
    %68 = arith.mulf %65, %67 : vector<8x128xf32>
    %c0_29 = arith.constant 0 : index
    %c0_30 = arith.constant 0 : index
    %69 = vector.load %arg5[%c0_29, %c0_30] : memref<1x128xf32, #tpu.memory_space<vmem>>, vector<1x128xf32>
    %70 = vector.broadcast %69 : vector<1x128xf32> to vector<8x128xf32>
    %71 = arith.addf %68, %70 : vector<8x128xf32>
    %72 = vector.shape_cast %71 : vector<8x128xf32> to vector<1x8x128xf32>
    %73 = vector.shape_cast %48 : vector<8x128xf32> to vector<1x8x128xf32>
    %c0_31 = arith.constant 0 : index
    %c0_32 = arith.constant 0 : index
    %74 = vector.load %arg6[%c0_31, %c0_32] : memref<8x8xf32, #tpu.memory_space<vmem>>, vector<8x8xf32>
    %c0_33 = arith.constant 0 : index
    %c0_34 = arith.constant 0 : index
    %75 = vector.load %arg7[%c0_33, %c0_34] : memref<8x1xf32, #tpu.memory_space<vmem>>, vector<8x1xf32>
    %c0_35 = arith.constant 0 : index
    %c0_36 = arith.constant 0 : index
    %76 = vector.load %arg8[%c0_35, %c0_36] : memref<128x128xf32, #tpu.memory_space<vmem>>, vector<128x128xf32>
    %c0_37 = arith.constant 0 : index
    %c0_38 = arith.constant 0 : index
    %77 = vector.load %arg9[%c0_37, %c0_38] : memref<1x128xf32, #tpu.memory_space<vmem>>, vector<1x128xf32>
    %78 = vector.shape_cast %72 : vector<1x8x128xf32> to vector<8x128xf32>
    %cst_39 = arith.constant dense<0.000000e+00> : vector<8x128xf32>
    %79 = tpu.matmul %74, %78, %cst_39 {dimension_numbers = #tpu.dot_dimension_numbers<[1], [0], [0], [1], [0, 0, 1, 1], [], []>} : vector<8x8xf32>, vector<8x128xf32>, vector<8x128xf32> -> vector<8x128xf32>
    %80 = vector.broadcast %75 : vector<8x1xf32> to vector<8x128xf32>
    %81 = arith.addf %79, %80 : vector<8x128xf32>
    %82 = vector.shape_cast %73 : vector<1x8x128xf32> to vector<8x128xf32>
    %83 = arith.mulf %81, %82 : vector<8x128xf32>
    %cst_40 = arith.constant dense<0.000000e+00> : vector<8x128xf32>
    %84 = tpu.matmul %83, %76, %cst_40 {dimension_numbers = #tpu.dot_dimension_numbers<[1], [0], [0], [1], [0, 0, 1, 1], [], []>} : vector<8x128xf32>, vector<128x128xf32>, vector<8x128xf32> -> vector<8x128xf32>
    %85 = vector.broadcast %77 : vector<1x128xf32> to vector<8x128xf32>
    %86 = arith.addf %84, %85 : vector<8x128xf32>
    %c0_41 = arith.constant 0 : index
    %c0_42 = arith.constant 0 : index
    %c0_43 = arith.constant 0 : index
    %87 = vector.load %arg10[%c0_41, %c0_42, %c0_43] : memref<1x8x128xf32, #tpu.memory_space<vmem>>, vector<1x8x128xf32>
    %88 = vector.shape_cast %87 : vector<1x8x128xf32> to vector<8x128xf32>
    %89 = vector.shape_cast %86 : vector<8x128xf32> to vector<1x8x128xf32>
    tpu.vector_store %arg10[%c0_41, %c0_42, %c0_43], %89 {strides = array<i32>} : memref<1x8x128xf32, #tpu.memory_space<vmem>>, vector<1x8x128xf32>,
    return
  }
  func.func @transform_0(%arg0: i32) -> (i32, i32, i32) {
    %c0_i32 = arith.constant 0 : i32
    %c0_i32_0 = arith.constant 0 : i32
    %c0_i32_1 = arith.constant 0 : i32
    return %arg0, %c0_i32, %c0_i32_0 : i32, i32, i32
  }
  func.func @transform_1(%arg0: i32) -> (i32, i32) {
    %c0_i32 = arith.constant 0 : i32
    %c0_i32_0 = arith.constant 0 : i32
    %c0_i32_1 = arith.constant 0 : i32
    return %c0_i32, %c0_i32_0 : i32, i32
  }
  func.func @transform_2(%arg0: i32) -> (i32, i32) {
    %c0_i32 = arith.constant 0 : i32
    %c0_i32_0 = arith.constant 0 : i32
    %c0_i32_1 = arith.constant 0 : i32
    return %c0_i32, %c0_i32_0 : i32, i32
  }
  func.func @transform_3(%arg0: i32) -> (i32, i32) {
    %c0_i32 = arith.constant 0 : i32
    %c0_i32_0 = arith.constant 0 : i32
    %c0_i32_1 = arith.constant 0 : i32
    return %c0_i32, %c0_i32_0 : i32, i32
  }
  func.func @transform_4(%arg0: i32) -> (i32, i32) {
    %c0_i32 = arith.constant 0 : i32
    %c0_i32_0 = arith.constant 0 : i32
    %c0_i32_1 = arith.constant 0 : i32
    return %c0_i32, %c0_i32_0 : i32, i32
  }
  func.func @transform_5(%arg0: i32) -> (i32, i32) {
    %c0_i32 = arith.constant 0 : i32
    %c0_i32_0 = arith.constant 0 : i32
    %c0_i32_1 = arith.constant 0 : i32
    return %c0_i32, %c0_i32_0 : i32, i32
  }
  func.func @transform_6(%arg0: i32) -> (i32, i32) {
    %c0_i32 = arith.constant 0 : i32
    %c0_i32_0 = arith.constant 0 : i32
    %c0_i32_1 = arith.constant 0 : i32
    return %c0_i32, %c0_i32_0 : i32, i32
  }
  func.func @transform_7(%arg0: i32) -> (i32, i32) {
    %c0_i32 = arith.constant 0 : i32
    %c0_i32_0 = arith.constant 0 : i32
    %c0_i32_1 = arith.constant 0 : i32
    return %c0_i32, %c0_i32_0 : i32, i32
  }
  func.func @transform_8(%arg0: i32) -> (i32, i32) {
    %c0_i32 = arith.constant 0 : i32
    %c0_i32_0 = arith.constant 0 : i32
    %c0_i32_1 = arith.constant 0 : i32
    return %c0_i32, %c0_i32_0 : i32, i32
  }
  func.func @transform_9(%arg0: i32) -> (i32, i32, i32) {
    %c0_i32 = arith.constant 0 : i32
    %c0_i32_0 = arith.constant 0 : i32
    %c0_i32_1 = arith.constant 0 : i32
    return %arg0, %c0_i32, %c0_i32_0 : i32, i32, i32
  }
}

</mosaic_0001>

<llo_original>
// kernel: gmlp_block.1
$region0: #{gmlp_block.1}
  #allocation0 [shape = 'u32[]', space=smem, size = 0x4, offset = 0x4, fixed_abs, tag = 'smem constant byte address 0x4 - core index']
  #allocation1 [shape = 'u32[72,128]{1,0:T(1,128)}', space=vmem, size = 0x9000, scoped, tag = 'internal scratch']
  %s0 = inlined_call_operand.hbm [shape: f32[2,8,128], index: 0, kind: input, shape index: {}]
  %s1 = inlined_call_operand.hbm [shape: f32[128,256], index: 1, kind: input, shape index: {}]
  %s2 = inlined_call_operand.vmem [shape: f32[1,256], index: 2, kind: input, shape index: {}]
  %s3 = inlined_call_operand.vmem [shape: f32[1,128], index: 3, kind: input, shape index: {}]
  %s4 = inlined_call_operand.vmem [shape: f32[1,128], index: 4, kind: input, shape index: {}]
  %s5 = inlined_call_operand.vmem [shape: f32[8,8], index: 5, kind: input, shape index: {}]
  %s6 = inlined_call_operand.vmem [shape: f32[8,1], index: 6, kind: input, shape index: {}]
  %s7 = inlined_call_operand.hbm [shape: f32[128,128], index: 7, kind: input, shape index: {}]
  %s8 = inlined_call_operand.vmem [shape: f32[1,128], index: 8, kind: input, shape index: {}]
  %s9 = inlined_call_operand.hbm [shape: f32[2,8,128], index: 9, kind: output, shape index: {}]
  %s10 = sld [smem:[#allocation0]]
  $region81: #{gmlp_block.1} parent=0
    _
  %s12 = ssub.s32 1, %s10
  %s13 = scalar_select 0, %s12, %s10
  $region1: #{gmlp_block.1} parent=0
    #allocation2 [shape = 'u8[8192]{0}', space=vmem, size = 0x2000, scoped, tag = 'input window, operand 0']
    #allocation3 [shape = 's32[2]{0}', space=sflag, size = 0x8, scoped, tag = 'scoped memory for gmlp_block.1']
    #allocation4 [shape = 's32[2]{0}', space=sflag, size = 0x8, scoped, tag = 'scoped memory for gmlp_block.1']
    #allocation5 [shape = 'u8[131072]{0}', space=vmem, size = 0x20000, scoped, tag = 'input window, operand 1, single buffered']
    #allocation6 [shape = 's32[1]{0}', space=sflag, size = 0x4, scoped, tag = 'scoped memory for gmlp_block.1']
    #allocation7 [shape = 'u8[65536]{0}', space=vmem, size = 0x10000, scoped, tag = 'input window, operand 7, single buffered']
    #allocation8 [shape = 'u8[8192]{0}', space=vmem, size = 0x2000, scoped, tag = 'output window, operand 0']
    %14 = vsyncpa [#allocation3], 0
    %s15 = scalar_lea.sflag [#allocation3], 1
    %16 = vsyncpa %s15, 0
    %17 = vsyncpa [#allocation6], 0
    %18 = vsyncpa [#allocation4], 0
    %s19 = scalar_lea.sflag [#allocation4], 1
    %20 = vsyncpa %s19, 0
    loop: start=0, step=1, limit=4
    $region2: #{gmlp_block.1} parent=1 // loop_pre_header
      _
    $region3: #{gmlp_block.1} parent=1 // loop_header
      %s22 = sphi 0, %s26
      %p23 = scmp.ge.s32.totalorder %s22, 4
      %s32 = sphi 0, %s34
      %s35 = sphi 0, %s32
      %s36 = sphi 0, %s35
      %s52 = sphi 0, %s36
      %s56 = sphi 0, %s56
      %s58 = sphi 0, %s56
      %s59 = sphi 0, %s58
      %s73 = sphi 0, %s59
      %s77 = sphi 0, %s77
      %s79 = sphi 0, %s77
      %s80 = sphi 0, %s79
      %s94 = sphi 0, %s80
      %s98 = sphi 0, %s98
      %s100 = sphi 0, %s98
      %s101 = sphi 0, %s100
      %s115 = sphi 0, %s101
      %s119 = sphi 0, %s119
      %s121 = sphi 0, %s119
      %s122 = sphi 0, %s121
      %s136 = sphi 0, %s122
      %s140 = sphi 0, %s140
      %s142 = sphi 0, %s140
      %s143 = sphi 0, %s142
      %s157 = sphi 0, %s143
      %s161 = sphi 0, %s161
      %s163 = sphi 0, %s161
      %s164 = sphi 0, %s163
      %s178 = sphi 0, %s164
      %s182 = sphi 0, %s182
      %s184 = sphi 0, %s182
      %s185 = sphi 0, %s184
      %s199 = sphi 0, %s185
      %s203 = sphi 0, %s203
      %s205 = sphi 0, %s203
      %s206 = sphi 0, %s205
      %s220 = sphi 0, %s206
      %s226 = sphi 0, %s228
      %s229 = sphi 0, %s226
      %s230 = sphi 0, %s229
      %s246 = sphi 0, %s230
    $region4: #{gmlp_block.1} parent=1 // loop_header_branch
      %25 = sbr.rel (%p23) target = $region8
    $region5: #{gmlp_block.1} parent=1 // loop_body
      %s27 = ssub.s32 %s22, 1
      %s28 = ssub.s32 %s22, 2
      %s29 = sadd.s32 %s22, 1
      %s30 = ssub.s32 %s22, %s29
      %p31 = scmp.eq.s32.totalorder %s30, 0
      %s33 = sadd.s32 %s32, 1
      %s34 = scalar_select %p31, %s32, %s33
      %p37 = pneg %p31
      %p38 = scmp.eq.s32.totalorder %s22, 1
      %p39 = por %p37, %p38
      %p40 = scmp.ne.s32.totalorder %s32, %s35
      %p41 = scmp.eq.s32.totalorder %s22, 0
      %p42 = por %p40, %p41
      %p43 = scmp.ne.s32.totalorder %s32, %s35
      %p44 = scmp.eq.s32.totalorder %s27, 1
      %p45 = por %p43, %p44
      %p46 = scmp.ne.s32.totalorder %s35, %s36
      %p47 = scmp.eq.s32.totalorder %s27, 0
      %p48 = por %p46, %p47
      %p49 = scmp.ne.s32.totalorder %s35, %s36
      %p50 = scmp.eq.s32.totalorder %s28, 1
      %p51 = por %p49, %p50
      %p53 = scmp.ne.s32.totalorder %s36, %s52
      %p54 = scmp.eq.s32.totalorder %s28, 0
      %p55 = por %p53, %p54
      %s57 = sadd.s32 %s56, 1
      %p60 = scmp.eq.s32.totalorder %s22, 1
      %p61 = scmp.ne.s32.totalorder %s56, %s58
      %p62 = scmp.eq.s32.totalorder %s22, 0
      %p63 = por %p61, %p62
      %p64 = scmp.ne.s32.totalorder %s56, %s58
      %p65 = scmp.eq.s32.totalorder %s27, 1
      %p66 = por %p64, %p65
      %p67 = scmp.ne.s32.totalorder %s58, %s59
      %p68 = scmp.eq.s32.totalorder %s27, 0
      %p69 = por %p67, %p68
      %p70 = scmp.ne.s32.totalorder %s58, %s59
      %p71 = scmp.eq.s32.totalorder %s28, 1
      %p72 = por %p70, %p71
      %p74 = scmp.ne.s32.totalorder %s59, %s73
      %p75 = scmp.eq.s32.totalorder %s28, 0
      %p76 = por %p74, %p75
      %s78 = sadd.s32 %s77, 1
      %p81 = scmp.eq.s32.totalorder %s22, 1
      %p82 = scmp.ne.s32.totalorder %s77, %s79
      %p83 = scmp.eq.s32.totalorder %s22, 0
      %p84 = por %p82, %p83
      %p85 = scmp.ne.s32.totalorder %s77, %s79
      %p86 = scmp.eq.s32.totalorder %s27, 1
      %p87 = por %p85, %p86
      %p88 = scmp.ne.s32.totalorder %s79, %s80
      %p89 = scmp.eq.s32.totalorder %s27, 0
      %p90 = por %p88, %p89
      %p91 = scmp.ne.s32.totalorder %s79, %s80
      %p92 = scmp.eq.s32.totalorder %s28, 1
      %p93 = por %p91, %p92
      %p95 = scmp.ne.s32.totalorder %s80, %s94
      %p96 = scmp.eq.s32.totalorder %s28, 0
      %p97 = por %p95, %p96
      %s99 = sadd.s32 %s98, 1
      %p102 = scmp.eq.s32.totalorder %s22, 1
      %p103 = scmp.ne.s32.totalorder %s98, %s100
      %p104 = scmp.eq.s32.totalorder %s22, 0
      %p105 = por %p103, %p104
      %p106 = scmp.ne.s32.totalorder %s98, %s100
      %p107 = scmp.eq.s32.totalorder %s27, 1
      %p108 = por %p106, %p107
      %p109 = scmp.ne.s32.totalorder %s100, %s101
      %p110 = scmp.eq.s32.totalorder %s27, 0
      %p111 = por %p109, %p110
      %p112 = scmp.ne.s32.totalorder %s100, %s101
      %p113 = scmp.eq.s32.totalorder %s28, 1
      %p114 = por %p112, %p113
      %p116 = scmp.ne.s32.totalorder %s101, %s115
      %p117 = scmp.eq.s32.totalorder %s28, 0
      %p118 = por %p116, %p117
      %s120 = sadd.s32 %s119, 1
      %p123 = scmp.eq.s32.totalorder %s22, 1
      %p124 = scmp.ne.s32.totalorder %s119, %s121
      %p125 = scmp.eq.s32.totalorder %s22, 0
      %p126 = por %p124, %p125
      %p127 = scmp.ne.s32.totalorder %s119, %s121
      %p128 = scmp.eq.s32.totalorder %s27, 1
      %p129 = por %p127, %p128
      %p130 = scmp.ne.s32.totalorder %s121, %s122
      %p131 = scmp.eq.s32.totalorder %s27, 0
      %p132 = por %p130, %p131
      %p133 = scmp.ne.s32.totalorder %s121, %s122
      %p134 = scmp.eq.s32.totalorder %s28, 1
      %p135 = por %p133, %p134
      %p137 = scmp.ne.s32.totalorder %s122, %s136
      %p138 = scmp.eq.s32.totalorder %s28, 0
      %p139 = por %p137, %p138
      %s141 = sadd.s32 %s140, 1
      %p144 = scmp.eq.s32.totalorder %s22, 1
      %p145 = scmp.ne.s32.totalorder %s140, %s142
      %p146 = scmp.eq.s32.totalorder %s22, 0
      %p147 = por %p145, %p146
      %p148 = scmp.ne.s32.totalorder %s140, %s142
      %p149 = scmp.eq.s32.totalorder %s27, 1
      %p150 = por %p148, %p149
      %p151 = scmp.ne.s32.totalorder %s142, %s143
      %p152 = scmp.eq.s32.totalorder %s27, 0
      %p153 = por %p151, %p152
      %p154 = scmp.ne.s32.totalorder %s142, %s143
      %p155 = scmp.eq.s32.totalorder %s28, 1
      %p156 = por %p154, %p155
      %p158 = scmp.ne.s32.totalorder %s143, %s157
      %p159 = scmp.eq.s32.totalorder %s28, 0
      %p160 = por %p158, %p159
      %s162 = sadd.s32 %s161, 1
      %p165 = scmp.eq.s32.totalorder %s22, 1
      %p166 = scmp.ne.s32.totalorder %s161, %s163
      %p167 = scmp.eq.s32.totalorder %s22, 0
      %p168 = por %p166, %p167
      %p169 = scmp.ne.s32.totalorder %s161, %s163
      %p170 = scmp.eq.s32.totalorder %s27, 1
      %p171 = por %p169, %p170
      %p172 = scmp.ne.s32.totalorder %s163, %s164
      %p173 = scmp.eq.s32.totalorder %s27, 0
      %p174 = por %p172, %p173
      %p175 = scmp.ne.s32.totalorder %s163, %s164
      %p176 = scmp.eq.s32.totalorder %s28, 1
      %p177 = por %p175, %p176
      %p179 = scmp.ne.s32.totalorder %s164, %s178
      %p180 = scmp.eq.s32.totalorder %s28, 0
      %p181 = por %p179, %p180
      %s183 = sadd.s32 %s182, 1
      %p186 = scmp.eq.s32.totalorder %s22, 1
      %p187 = scmp.ne.s32.totalorder %s182, %s184
      %p188 = scmp.eq.s32.totalorder %s22, 0
      %p189 = por %p187, %p188
      %p190 = scmp.ne.s32.totalorder %s182, %s184
      %p191 = scmp.eq.s32.totalorder %s27, 1
      %p192 = por %p190, %p191
      %p193 = scmp.ne.s32.totalorder %s184, %s185
      %p194 = scmp.eq.s32.totalorder %s27, 0
      %p195 = por %p193, %p194
      %p196 = scmp.ne.s32.totalorder %s184, %s185
      %p197 = scmp.eq.s32.totalorder %s28, 1
      %p198 = por %p196, %p197
      %p200 = scmp.ne.s32.totalorder %s185, %s199
      %p201 = scmp.eq.s32.totalorder %s28, 0
      %p202 = por %p200, %p201
      %s204 = sadd.s32 %s203, 1
      %p207 = scmp.eq.s32.totalorder %s22, 1
      %p208 = scmp.ne.s32.totalorder %s203, %s205
      %p209 = scmp.eq.s32.totalorder %s22, 0
      %p210 = por %p208, %p209
      %p211 = scmp.ne.s32.totalorder %s203, %s205
      %p212 = scmp.eq.s32.totalorder %s27, 1
      %p213 = por %p211, %p212
      %p214 = scmp.ne.s32.totalorder %s205, %s206
      %p215 = scmp.eq.s32.totalorder %s27, 0
      %p216 = por %p214, %p215
      %p217 = scmp.ne.s32.totalorder %s205, %s206
      %p218 = scmp.eq.s32.totalorder %s28, 1
      %p219 = por %p217, %p218
      %p221 = scmp.ne.s32.totalorder %s206, %s220
      %p222 = scmp.eq.s32.totalorder %s28, 0
      %p223 = por %p221, %p222
      %s224 = ssub.s32 %s22, %s29
      %p225 = scmp.eq.s32.totalorder %s224, 0
      %s227 = sadd.s32 %s226, 1
      %s228 = scalar_select %p225, %s226, %s227
      %p231 = pneg %p225
      %p232 = scmp.eq.s32.totalorder %s22, 1
      %p233 = por %p231, %p232
      %p234 = scmp.ne.s32.totalorder %s226, %s229
      %p235 = scmp.eq.s32.totalorder %s22, 0
      %p236 = por %p234, %p235
      %p237 = scmp.ne.s32.totalorder %s226, %s229
      %p238 = scmp.eq.s32.totalorder %s27, 1
      %p239 = por %p237, %p238
      %p240 = scmp.ne.s32.totalorder %s229, %s230
      %p241 = scmp.eq.s32.totalorder %s27, 0
      %p242 = por %p240, %p241
      %p243 = scmp.ne.s32.totalorder %s229, %s230
      %p244 = scmp.eq.s32.totalorder %s28, 1
      %p245 = por %p243, %p244
      %p247 = scmp.ne.s32.totalorder %s230, %s246
      %p248 = scmp.eq.s32.totalorder %s28, 0
      %p249 = por %p247, %p248
      %p250 = scmp.le.s32.totalorder 1, %s22
      %p251 = scmp.lt.s32.totalorder %s22, 3
      %p252 = pnand %p250, %p251
      %p253 = pneg %p252
      // Predicated region
      $region9: #{gmlp_block.1} parent=5 // pred_check
        _
      $region10: #{gmlp_block.1} parent=5 // pred_check_branch
        %255 = sbr.rel (%p252) target = $region12
      $region11: #{gmlp_block.1} parent=5 // pred_region
        %s256 = ssub.s32 %s22, 1
        // Predicated region
        $region13: #{gmlp_block.1} parent=11 // pred_check
          %p257 = pneg %p69
        $region14: #{gmlp_block.1} parent=11 // pred_check_branch
          %259 = sbr.rel (%p257) target = $region16
        $region15: #{gmlp_block.1} parent=11 // pred_region
          %261 = vsyncadd [#allocation6], 0
          %s262 = sshll.u32 %s1, 4
          %s263 = int_to_ptr.hbm [resolvable:$true] %s262
          %s264 = sshll.u32 [#allocation5], 4
          %s265 = int_to_ptr.vmem [resolvable:$true] %s264
          %270 = dma.hbm_to_vmem [thread:$0]  %s263, 4096, %s265, [#allocation6], 256, 256, 16
        $region16: #{gmlp_block.1} parent=11 // pred_fallthru
          _
        // Predicated region
        $region17: #{gmlp_block.1} parent=11 // pred_check
          %p271 = pneg %p90
        $region18: #{gmlp_block.1} parent=11 // pred_check_branch
          %273 = sbr.rel (%p271) target = $region20
        $region19: #{gmlp_block.1} parent=11 // pred_region
          _
        $region20: #{gmlp_block.1} parent=11 // pred_fallthru
          _
        // Predicated region
        $region21: #{gmlp_block.1} parent=11 // pred_check
          %p274 = pneg %p111
        $region22: #{gmlp_block.1} parent=11 // pred_check_branch
          %276 = sbr.rel (%p274) target = $region24
        $region23: #{gmlp_block.1} parent=11 // pred_region
          _
        $region24: #{gmlp_block.1} parent=11 // pred_fallthru
          _
        // Predicated region
        $region25: #{gmlp_block.1} parent=11 // pred_check
          %p277 = pneg %p132
        $region26: #{gmlp_block.1} parent=11 // pred_check_branch
          %279 = sbr.rel (%p277) target = $region28
        $region27: #{gmlp_block.1} parent=11 // pred_region
          _
        $region28: #{gmlp_block.1} parent=11 // pred_fallthru
          _
        // Predicated region
        $region29: #{gmlp_block.1} parent=11 // pred_check
          %p280 = pneg %p153
        $region30: #{gmlp_block.1} parent=11 // pred_check_branch
          %282 = sbr.rel (%p280) target = $region32
        $region31: #{gmlp_block.1} parent=11 // pred_region
          _
        $region32: #{gmlp_block.1} parent=11 // pred_fallthru
          _
        // Predicated region
        $region33: #{gmlp_block.1} parent=11 // pred_check
          %p283 = pneg %p174
        $region34: #{gmlp_block.1} parent=11 // pred_check_branch
          %285 = sbr.rel (%p283) target = $region36
        $region35: #{gmlp_block.1} parent=11 // pred_region
          _
        $region36: #{gmlp_block.1} parent=11 // pred_fallthru
          _
        // Predicated region
        $region37: #{gmlp_block.1} parent=11 // pred_check
          %p286 = pneg %p195
        $region38: #{gmlp_block.1} parent=11 // pred_check_branch
          %288 = sbr.rel (%p286) target = $region40
        $region39: #{gmlp_block.1} parent=11 // pred_region
          %290 = vsyncadd [#allocation6], 0
          %s291 = sshll.u32 %s7, 4
          %s292 = int_to_ptr.hbm [resolvable:$true] %s291
          %s293 = sshll.u32 [#allocation7], 4
          %s294 = int_to_ptr.vmem [resolvable:$true] %s293
          %299 = dma.hbm_to_vmem [thread:$0]  %s292, 2048, %s294, [#allocation6], 128, 128, 8
        $region40: #{gmlp_block.1} parent=11 // pred_fallthru
          _
        // Predicated region
        $region41: #{gmlp_block.1} parent=11 // pred_check
          %p300 = pneg %p216
        $region42: #{gmlp_block.1} parent=11 // pred_check_branch
          %302 = sbr.rel (%p300) target = $region44
        $region43: #{gmlp_block.1} parent=11 // pred_region
          _
        $region44: #{gmlp_block.1} parent=11 // pred_fallthru
          _
      $region12: #{gmlp_block.1} parent=5 // pred_fallthru
        _
      %p303 = scmp.lt.s32.totalorder %s22, 2
      // Predicated region
      $region45: #{gmlp_block.1} parent=5 // pred_check
        %p304 = pneg %p303
      $region46: #{gmlp_block.1} parent=5 // pred_check_branch
        %306 = sbr.rel (%p304) target = $region48
      $region47: #{gmlp_block.1} parent=5 // pred_region
        // Predicated region
        $region49: #{gmlp_block.1} parent=47 // pred_check
          %p307 = pneg %p42
        $region50: #{gmlp_block.1} parent=47 // pred_check_branch
          %309 = sbr.rel (%p307) target = $region52
        $region51: #{gmlp_block.1} parent=47 // pred_region
          %s310 = sand.u32 %s32, 1
          %s311 = scalar_lea.sflag [#allocation3], %s310
          %s312 = sand.u32 %s32, 1
          %s313 = smul.addr %s312, 8
          %s314 = scalar_lea.vmem [#allocation2], %s313
          %316 = vsyncadd %s311, 0
          %s317 = smul.addr %s22, 8
          %s318 = scalar_lea.hbm %s0, %s317
          %s320 = sshll.u32 %s318, 4
          %s321 = int_to_ptr.hbm [resolvable:$true] %s320
          %s322 = sshll.u32 %s314, 4
          %s323 = int_to_ptr.vmem [resolvable:$true] %s322
          %325 = dma.hbm_to_vmem [thread:$0]  %s321, 128, %s323, %s311
        $region52: #{gmlp_block.1} parent=47 // pred_fallthru
          _
      $region48: #{gmlp_block.1} parent=5 // pred_fallthru
        _
      %p326 = scmp.le.s32.totalorder 1, %s22
      %p327 = scmp.lt.s32.totalorder %s22, 3
      %p328 = pnand %p326, %p327
      %p329 = pneg %p328
      // Predicated region
      $region53: #{gmlp_block.1} parent=5 // pred_check
        _
      $region54: #{gmlp_block.1} parent=5 // pred_check_branch
        %331 = sbr.rel (%p328) target = $region56
      $region55: #{gmlp_block.1} parent=5 // pred_region
        %s332 = ssub.s32 %s22, 1
        %s333 = sand.u32 %s35, 1
        %s334 = scalar_lea.sflag [#allocation3], %s333
        %s335 = sand.u32 %s35, 1
        %s336 = smul.addr %s335, 8
        %s337 = scalar_lea.vmem [#allocation2], %s336
        // Predicated region
        $region57: #{gmlp_block.1} parent=55 // pred_check
          %p338 = pneg %p48
        $region58: #{gmlp_block.1} parent=55 // pred_check_branch
          %340 = sbr.rel (%p338) target = $region60
        $region59: #{gmlp_block.1} parent=55 // pred_region
          %342 = dma.done %s334, 128
        $region60: #{gmlp_block.1} parent=55 // pred_fallthru
          _
        // Predicated region
        $region61: #{gmlp_block.1} parent=55 // pred_check
          %p343 = pneg %p69
        $region62: #{gmlp_block.1} parent=55 // pred_check_branch
          %345 = sbr.rel (%p343) target = $region64
        $region63: #{gmlp_block.1} parent=55 // pred_region
          %347 = dma.done [#allocation6], 4096
        $region64: #{gmlp_block.1} parent=55 // pred_fallthru
          _
        // Predicated region
        $region65: #{gmlp_block.1} parent=55 // pred_check
          %p348 = pneg %p195
        $region66: #{gmlp_block.1} parent=55 // pred_check_branch
          %350 = sbr.rel (%p348) target = $region68
        $region67: #{gmlp_block.1} parent=55 // pred_region
          %352 = dma.done [#allocation6], 2048
        $region68: #{gmlp_block.1} parent=55 // pred_fallthru
          _
        %s353 = sand.u32 %s35, 1
        %s354 = scalar_lea.sflag [#allocation3], %s353
        %s355 = sand.u32 %s35, 1
        %s356 = smul.addr %s355, 8
        %s357 = scalar_lea.vmem [#allocation2], %s356
        %p358 = pneg %p48
        %p359 = pneg %p45
        %p360 = pneg %p69
        %p361 = pneg %p66
        %p362 = pneg %p90
        %p363 = pneg %p87
        %p364 = pneg %p111
        %p365 = pneg %p108
        %p366 = pneg %p132
        %p367 = pneg %p129
        %p368 = pneg %p153
        %p369 = pneg %p150
        %p370 = pneg %p174
        %p371 = pneg %p171
        %p372 = pneg %p195
        %p373 = pneg %p192
        %p374 = pneg %p216
        %p375 = pneg %p213
        %p376 = pneg %p242
        %p377 = pneg %p239
        %s378 = sand.u32 %s229, 1
        %s379 = scalar_lea.sflag [#allocation4], %s378
        %s380 = sand.u32 %s229, 1
        %s381 = smul.addr %s380, 8
        %s382 = scalar_lea.vmem [#allocation8], %s381
        %v383 = vld [vmem:[%s337] sm:$0xff]
        %v384 = vld [vmem:[#allocation5] sm:$0xff]
        %v385 = vld [vmem:[#allocation5 + $0x8] sm:$0xff]
        %v386 = vld [vmem:[#allocation5 + $0x10] sm:$0xff]
        %v387 = vld [vmem:[#allocation5 + $0x18] sm:$0xff]
        %v388 = vld [vmem:[#allocation5 + $0x20] sm:$0xff]
        %v389 = vld [vmem:[#allocation5 + $0x28] sm:$0xff]
        %v390 = vld [vmem:[#allocation5 + $0x30] sm:$0xff]
        %v391 = vld [vmem:[#allocation5 + $0x38] sm:$0xff]
        %v392 = vld [vmem:[#allocation5 + $0x40] sm:$0xff]
        %v393 = vld [vmem:[#allocation5 + $0x48] sm:$0xff]
        %v394 = vld [vmem:[#allocation5 + $0x50] sm:$0xff]
        %v395 = vld [vmem:[#allocation5 + $0x58] sm:$0xff]
        %v396 = vld [vmem:[#allocation5 + $0x60] sm:$0xff]
        %v397 = vld [vmem:[#allocation5 + $0x68] sm:$0xff]
        %v398 = vld [vmem:[#allocation5 + $0x70] sm:$0xff]
        %v399 = vld [vmem:[#allocation5 + $0x78] sm:$0xff]
        %v400 = vld [vmem:[#allocation5 + $0x80] sm:$0xff]
        %v401 = vld [vmem:[#allocation5 + $0x88] sm:$0xff]
        %v402 = vld [vmem:[#allocation5 + $0x90] sm:$0xff]
        %v403 = vld [vmem:[#allocation5 + $0x98] sm:$0xff]
        %v404 = vld [vmem:[#allocation5 + $0xa0] sm:$0xff]
        %v405 = vld [vmem:[#allocation5 + $0xa8] sm:$0xff]
        %v406 = vld [vmem:[#allocation5 + $0xb0] sm:$0xff]
        %v407 = vld [vmem:[#allocation5 + $0xb8] sm:$0xff]
        %v408 = vld [vmem:[#allocation5 + $0xc0] sm:$0xff]
        %v409 = vld [vmem:[#allocation5 + $0xc8] sm:$0xff]
        %v410 = vld [vmem:[#allocation5 + $0xd0] sm:$0xff]
        %v411 = vld [vmem:[#allocation5 + $0xd8] sm:$0xff]
        %v412 = vld [vmem:[#allocation5 + $0xe0] sm:$0xff]
        %v413 = vld [vmem:[#allocation5 + $0xe8] sm:$0xff]
        %v414 = vld [vmem:[#allocation5 + $0xf0] sm:$0xff]
        %v415 = vld [vmem:[#allocation5 + $0xf8] sm:$0xff]
        %v416 = vld [vmem:[%s2] sm:$0x3]
        %v418 = vperm.slane %v416, 0
        %v419 = vperm.slane %v416, 1
        %422 = vmatpush.msra.mxu0 %v414
        %423 = vmatpush.msra.mxu0 %v412
        %424 = vmatpush.msra.mxu0 %v410
        %425 = vmatpush.msra.mxu0 %v408
        %426 = vmatpush.msra.mxu0 %v406
        %427 = vmatpush.msra.mxu0 %v404
        %428 = vmatpush.msra.mxu0 %v402
        %429 = vmatpush.msra.mxu0 %v400
        %430 = vmatpush.msra.mxu0 %v398
        %431 = vmatpush.msra.mxu0 %v396
        %432 = vmatpush.msra.mxu0 %v394
        %433 = vmatpush.msra.mxu0 %v392
        %434 = vmatpush.msra.mxu0 %v390
        %435 = vmatpush.msra.mxu0 %v388
        %436 = vmatpush.msra.mxu0 %v386
        %437 = vmatpush.msra.mxu0 %v384
        %438 = vmatmul.f32.gmra.mxu0 %v383
        %v439 = vpop.f32.mrf.mxu0
        %v440 = vadd.f32 %v418, %v439
        %441 = vdwg.mxu0
        %442 = vmatpush.msra.mxu0 %v415
        %443 = vmatpush.msra.mxu0 %v413
        %444 = vmatpush.msra.mxu0 %v411
        %445 = vmatpush.msra.mxu0 %v409
        %446 = vmatpush.msra.mxu0 %v407
        %447 = vmatpush.msra.mxu0 %v405
        %448 = vmatpush.msra.mxu0 %v403
        %449 = vmatpush.msra.mxu0 %v401
        %450 = vmatpush.msra.mxu0 %v399
        %451 = vmatpush.msra.mxu0 %v397
        %452 = vmatpush.msra.mxu0 %v395
        %453 = vmatpush.msra.mxu0 %v393
        %454 = vmatpush.msra.mxu0 %v391
        %455 = vmatpush.msra.mxu0 %v389
        %456 = vmatpush.msra.mxu0 %v387
        %457 = vmatpush.msra.mxu0 %v385
        %458 = vmatmul.f32.gmra.mxu0 %v383
        %v459 = vpop.f32.mrf.mxu0
        %v460 = vadd.f32 %v419, %v459
        %461 = vdwg.mxu0
        %v462 = vmul.f32 %v440, 0.5
        %v463 = vmul.f32 %v460, 0.5
        %v464 = vmul.f32 %v440, 0.70710677
        %v465 = vmul.f32 %v460, 0.70710677
        %vm466 = vcmp.ge.f32.partialorder %v464, 0.0
        %vm467 = vcmp.ge.f32.partialorder %v465, 0.0
        %v468 = vsel %vm466, 1.0, -1.0
        %v469 = vsel %vm467, 1.0, -1.0
        %v470 = vand.u32 2147483647, %v464
        %v471 = vand.u32 2147483647, %v465
        %v472 = vmul.f32 %v470, 0.3275911
        %v473 = vmul.f32 %v471, 0.3275911
        %v474 = vadd.f32 %v472, 1.0
        %v475 = vadd.f32 %v473, 1.0
        %v476 = vrcp.pop %v474
        %v477 = vmul.f32 %v474, %v476
        %v478 = vsub.f32 1.0, %v477
        %v479 = vmul.f32 %v476, %v478
        %v480 = vadd.f32 %v476, %v479
        %vm481 = vweird.f32 %v474
        %vm482 = vweird.f32 %v476
        %vm483 = vmor %vm481, %vm482
        %v484 = vsel %vm483, %v476, %v480
        %v485 = vand.u32 2147483647, %v474
        %vm486 = vcmp.eq.f32.partialorder %v485, 8.507059e+37
        %v487 = vand.u32 %v474, 2147483648
        %v488 = vor.u32 1.1754944e-38, %v487
        %v489 = vsel %vm486, %v488, %v484
        %v490 = vmul.f32 1.0, %v489
        %v491 = vrcp.pop %v475
        %v492 = vmul.f32 %v475, %v491
        %v493 = vsub.f32 1.0, %v492
        %v494 = vmul.f32 %v491, %v493
        %v495 = vadd.f32 %v491, %v494
        %vm496 = vweird.f32 %v475
        %vm497 = vweird.f32 %v491
        %vm498 = vmor %vm496, %vm497
        %v499 = vsel %vm498, %v491, %v495
        %v500 = vand.u32 2147483647, %v475
        %vm501 = vcmp.eq.f32.partialorder %v500, 8.507059e+37
        %v502 = vand.u32 %v475, 2147483648
        %v503 = vor.u32 1.1754944e-38, %v502
        %v504 = vsel %vm501, %v503, %v499
        %v505 = vmul.f32 1.0, %v504
        %v506 = vmul.f32 %v490, 1.0614054
        %v507 = vmul.f32 %v505, 1.0614054
        %v508 = vadd.f32 %v506, -1.4531521
        %v509 = vadd.f32 %v507, -1.4531521
        %v510 = vmul.f32 %v508, %v490
        %v511 = vmul.f32 %v509, %v505
        %v512 = vadd.f32 %v510, 1.4214138
        %v513 = vadd.f32 %v511, 1.4214138
        %v514 = vmul.f32 %v512, %v490
        %v515 = vmul.f32 %v513, %v505
        %v516 = vadd.f32 %v514, -0.28449672
        %v517 = vadd.f32 %v515, -0.28449672
        %v518 = vmul.f32 %v516, %v490
        %v519 = vmul.f32 %v517, %v505
        %v520 = vadd.f32 %v518, 0.2548296
        %v521 = vadd.f32 %v519, 0.2548296
        %v522 = vmul.f32 %v520, %v490
        %v523 = vmul.f32 %v521, %v505
        %v524 = vmul.f32 %v470, %v470
        %v525 = vmul.f32 %v471, %v471
        %v526 = vsub.f32 0.0, %v524
        %v527 = vsub.f32 0.0, %v525
        %v528 = vmul.f32 %v526, 1.442695
        %v529 = vpow.pop %v528
        %v530 = vmul.f32 %v527, 1.442695
        %v531 = vpow.pop %v530
        %v532 = vmul.f32 %v522, %v529
        %v533 = vmul.f32 %v523, %v531
        %v534 = vsub.f32 1.0, %v532
        %v535 = vsub.f32 1.0, %v533
        %v536 = vmul.f32 %v468, %v534
        %v537 = vmul.f32 %v469, %v535
        %v538 = vadd.f32 %v536, 1.0
        %v539 = vadd.f32 %v537, 1.0
        %v540 = vmul.f32 %v462, %v538
        %v541 = vmul.f32 %v463, %v539
        %542 = vadd.xlane.f32.xlu0 %v541
        %v543 = vpop.xlane.xlu0 %542
        %v544 = vrcp.pop 128.0
        %v545 = vmul.f32 128.0, %v544
        %v546 = vsub.f32 1.0, %v545
        %v547 = vmul.f32 %v544, %v546
        %v548 = vadd.f32 %v544, %v547
        %vm549 = vweird.f32 %v544
        %v550 = vsel %vm549, %v544, %v548
        %v551 = vmul.f32 %v543, %v550
        %v552 = vsub.f32 %v541, %v551
        %v553 = vmul.f32 %v552, %v552
        %554 = vadd.xlane.f32.xlu0 %v553
        %v555 = vpop.xlane.xlu0 %554
        %v556 = vmul.f32 %v555, %v550
        %v557 = vadd.f32 %v556, 1e-05
        %v558 = vrsqrt.pop %v557
        %v559 = vmul.f32 %v558, %v557
        %v560 = vmul.f32 %v559, %v558
        %v561 = vmul.f32 0.5, %v560
        %v562 = vsub.f32 1.5, %v561
        %v563 = vmul.f32 %v558, %v562
        %vm564 = vweird.f32 %v557
        %vm565 = vweird.f32 %v558
        %vm566 = vmor %vm564, %vm565
        %v567 = vsel %vm566, %v558, %v563
        %v568 = vmul.f32 %v552, %v567
        %v569 = vld [vmem:[%s3] sm:$0x1]
        %v571 = vperm.slane %v569, 0
        %v573 = vmul.f32 %v568, %v571
        %v574 = vld [vmem:[%s4] sm:$0x1]
        %v576 = vperm.slane %v574, 0
        %v578 = vadd.f32 %v573, %v576
        %v579 = vld [vmem:[%s5] sm:$0xff]
        %v580 = vld [vmem:[%s6] sm:$0xff]
        %v581 = vld [vmem:[#allocation7] sm:$0xff]
        %v582 = vld [vmem:[#allocation7 + $0x8] sm:$0xff]
        %v583 = vld [vmem:[#allocation7 + $0x10] sm:$0xff]
        %v584 = vld [vmem:[#allocation7 + $0x18] sm:$0xff]
        %v585 = vld [vmem:[#allocation7 + $0x20] sm:$0xff]
        %v586 = vld [vmem:[#allocation7 + $0x28] sm:$0xff]
        %v587 = vld [vmem:[#allocation7 + $0x30] sm:$0xff]
        %v588 = vld [vmem:[#allocation7 + $0x38] sm:$0xff]
        %v589 = vld [vmem:[#allocation7 + $0x40] sm:$0xff]
        %v590 = vld [vmem:[#allocation7 + $0x48] sm:$0xff]
        %v591 = vld [vmem:[#allocation7 + $0x50] sm:$0xff]
        %v592 = vld [vmem:[#allocation7 + $0x58] sm:$0xff]
        %v593 = vld [vmem:[#allocation7 + $0x60] sm:$0xff]
        %v594 = vld [vmem:[#allocation7 + $0x68] sm:$0xff]
        %v595 = vld [vmem:[#allocation7 + $0x70] sm:$0xff]
        %v596 = vld [vmem:[#allocation7 + $0x78] sm:$0xff]
        %v597 = vld [vmem:[%s8] sm:$0x1]
        %599 = vset.pattern.permute.xlu0 0
        %600 = vperm.xlu0 %599, %v580
        %v601 = vpop.permute.xlu0 %600
        %vm603 = vcmask 64512
        %v605 = vsel %vm603, %v579, 0
        %607 = vmatpush.msra.mxu0 0.0
        %608 = vmatpush.msra.mxu0 0.0
        %609 = vmatpush.msra.mxu0 0.0
        %610 = vmatpush.msra.mxu0 0.0
        %611 = vmatpush.msra.mxu0 0.0
        %612 = vmatpush.msra.mxu0 0.0
        %613 = vmatpush.msra.mxu0 0.0
        %614 = vmatpush.msra.mxu0 0.0
        %615 = vmatpush.msra.mxu0 0.0
        %616 = vmatpush.msra.mxu0 0.0
        %617 = vmatpush.msra.mxu0 0.0
        %618 = vmatpush.msra.mxu0 0.0
        %619 = vmatpush.msra.mxu0 0.0
        %620 = vmatpush.msra.mxu0 0.0
        %621 = vmatpush.msra.mxu0 0.0
        %622 = vmatpush.msra.mxu0 %v578
        %623 = vmatmul.f32.gmra.mxu0 %v605
        %v624 = vpop.f32.mrf.mxu0
        %v625 = vadd.f32 %v601, %v624
        %626 = vdwg.mxu0
        %v627 = vmul.f32 %v625, %v540
        %v629 = vperm.slane %v597, 0
        %631 = vmatpush.msra.mxu0 %v596
        %632 = vmatpush.msra.mxu0 %v595
        %633 = vmatpush.msra.mxu0 %v594
        %634 = vmatpush.msra.mxu0 %v593
        %635 = vmatpush.msra.mxu0 %v592
        %636 = vmatpush.msra.mxu0 %v591
        %637 = vmatpush.msra.mxu0 %v590
        %638 = vmatpush.msra.mxu0 %v589
        %639 = vmatpush.msra.mxu0 %v588
        %640 = vmatpush.msra.mxu0 %v587
        %641 = vmatpush.msra.mxu0 %v586
        %642 = vmatpush.msra.mxu0 %v585
        %643 = vmatpush.msra.mxu0 %v584
        %644 = vmatpush.msra.mxu0 %v583
        %645 = vmatpush.msra.mxu0 %v582
        %646 = vmatpush.msra.mxu0 %v581
        %647 = vmatmul.f32.gmra.mxu0 %v627
        %v648 = vpop.f32.mrf.mxu0
        %v649 = vadd.f32 %v629, %v648
        %650 = vdwg.mxu0
        %651 = vst [vmem:[%s382] sm:$0xff] %v649
        %s652 = sand.u32 %s229, 1
        %s653 = scalar_lea.sflag [#allocation4], %s652
        %s654 = sand.u32 %s229, 1
        %s655 = smul.addr %s654, 8
        %s656 = scalar_lea.vmem [#allocation8], %s655
        // Predicated region
        $region69: #{gmlp_block.1} parent=55 // pred_check
          %p657 = pneg %p239
        $region70: #{gmlp_block.1} parent=55 // pred_check_branch
          %659 = sbr.rel (%p657) target = $region72
        $region71: #{gmlp_block.1} parent=55 // pred_region
          %661 = vsyncadd %s653, 0
          %s662 = smul.addr %s27, 8
          %s663 = scalar_lea.hbm %s9, %s662
          %s665 = sshll.u32 %s656, 4
          %s666 = int_to_ptr.vmem [resolvable:$true] %s665
          %s667 = sshll.u32 %s663, 4
          %s668 = int_to_ptr.hbm [resolvable:$true] %s667
          %670 = dma.vmem_to_hbm [thread:$0]  %s666, 128, %s668, %s653
        $region72: #{gmlp_block.1} parent=55 // pred_fallthru
          _
      $region56: #{gmlp_block.1} parent=5 // pred_fallthru
        _
      %p671 = scmp.le.s32.totalorder 2, %s22
      // Predicated region
      $region73: #{gmlp_block.1} parent=5 // pred_check
        %p672 = pneg %p671
      $region74: #{gmlp_block.1} parent=5 // pred_check_branch
        %674 = sbr.rel (%p672) target = $region76
      $region75: #{gmlp_block.1} parent=5 // pred_region
        %s675 = ssub.s32 %s22, 2
        // Predicated region
        $region77: #{gmlp_block.1} parent=75 // pred_check
          %p676 = pneg %p245
        $region78: #{gmlp_block.1} parent=75 // pred_check_branch
          %678 = sbr.rel (%p676) target = $region80
        $region79: #{gmlp_block.1} parent=75 // pred_region
          %s679 = sand.u32 %s230, 1
          %s680 = scalar_lea.sflag [#allocation4], %s679
          %s681 = sand.u32 %s230, 1
          %s682 = smul.addr %s681, 8
          %s683 = scalar_lea.vmem [#allocation8], %s682
          %685 = dma.done %s680, 128
        $region80: #{gmlp_block.1} parent=75 // pred_fallthru
          _
      $region76: #{gmlp_block.1} parent=5 // pred_fallthru
        _
    $region6: #{gmlp_block.1} parent=1 // loop_footer
      %s26 = sadd.s32 1, %s22
    $region7: #{gmlp_block.1} parent=1 // loop_footer_branch
      %21 = sbr.rel target = $region3
    $region8: #{gmlp_block.1} parent=1 // loop_exit
      _
    %686 = vsyncpa [#allocation3], 1
    %s687 = scalar_lea.sflag [#allocation3], 1
    %688 = vsyncpa %s687, 1
    %689 = vsyncpa [#allocation6], 1
    %690 = vsyncpa [#allocation4], 1
    %s691 = scalar_lea.sflag [#allocation4], 1
    %692 = vsyncpa %s691, 1

</llo_original>
